<compile_context>
chip_gen: v7x
topology: tpu7x:2x2x1
jax: 0.10.0
libtpu: 0.0.40
codegen_flags: <defaults>
</compile_context>

<pallas_src>
import functools

import jax
import jax.numpy as jnp
from jax.experimental import pallas as pl
from jax.experimental.pallas import tpu as pltpu

_LANES = 128
_SUBLANES = 8


def _combined_loss_kernel(logits_ref, tgt_ref,
                          ce_ref, inter_ref, p2_ref, t_ref,
                          *, hw, s_tile, tiles_per_chunk, num_tiles, gamma,
                          needs_mask):
    i = pl.program_id(2)                          # tile index inside this chunk
    g = pl.program_id(0) * tiles_per_chunk + i    # global pixel-tile index

    @pl.when(i == 0)
    def _init():
        ce_ref[...] = jnp.zeros_like(ce_ref)
        inter_ref[...] = jnp.zeros_like(inter_ref)
        p2_ref[...] = jnp.zeros_like(p2_ref)
        t_ref[...] = jnp.zeros_like(t_ref)

    # logits: (C, S, 128) native dtype -> f32 in-kernel (mandatory on v5e).
    logits = logits_ref[...].astype(jnp.float32)
    tgt = tgt_ref[...]                            # (S, 128) int32

    # Softmax / log-sum-exp over the leading class axis: pure elementwise VPU
    # work over fully-occupied (8,128) vregs (pixels on sublanes *and* lanes).
    m = jnp.max(logits, axis=0, keepdims=True)    # (1, S, 128)
    e = jnp.exp(logits - m)
    denom = jnp.sum(e, axis=0, keepdims=True)     # (1, S, 128)
    inv = pl.reciprocal(denom, approx=True)       # EUP slot, ~free
    probs = e * inv                               # (C, S, 128), approx recip
    lse = m[0] + jnp.log(denom[0])                # (S, 128)

    class_ids = jax.lax.broadcasted_iota(jnp.int32, logits.shape, 0)
    eq = class_ids == tgt[None]                   # (C, S, 128) bool

    # Exact CE and exact target-class probability (no approx recip here).
    true_logit = jnp.sum(jnp.where(eq, logits, 0.0), axis=0)   # (S, 128)
    ce_pix = lse - true_logit                                  # -log p_target
    p_true = jnp.exp(-ce_pix)                                  # exact p_target

    if gamma == 2:
        p_pow = probs * probs
    else:
        p_pow = jnp.power(probs, jnp.float32(gamma))
    # onehot ** gamma == onehot (targets one-hot, gamma > 0 asserted in wrapper)

    def _accumulate(eq_v, ce_v, p_pow_v):
        # Per-step partial reduction over the sublane (pixel-row) axis into
        # small lane-dense accumulators resident in the output blocks: mostly
        # VALU vreg adds plus one XLU sublane-reduce per statistic. No big
        # scratch read-modify-write -> store slot no longer binds (v5e) and
        # VMEM footprint stays tiny even with very large tiles (v7x).
        ce_ref[...] += jnp.sum(ce_v, axis=0, keepdims=True)                    # (1,128)
        inter_ref[...] += jnp.sum(jnp.where(eq_v, p_true[None], 0.0), axis=1)  # (C,128)
        p2_ref[...] += jnp.sum(p_pow_v, axis=1)                                # (C,128)
        t_ref[...] += jnp.sum(jnp.where(eq_v, 1.0, 0.0), axis=1)               # (C,128)

    if needs_mask:
        # Padded pixels can only live in the globally-last tile; keep mask
        # construction and masked selects off the hot path.
        is_last = g == num_tiles - 1

        @pl.when(g < num_tiles - 1)
        def _hot():
            _accumulate(eq, ce_pix, p_pow)

        @pl.when(is_last)
        def _tail():
            s_idx = jax.lax.broadcasted_iota(jnp.int32, (s_tile, _LANES), 0)
            l_idx = jax.lax.broadcasted_iota(jnp.int32, (s_tile, _LANES), 1)
            pix = (g * s_tile + s_idx) * _LANES + l_idx
            valid = pix < hw                                   # (S, 128) bool
            _accumulate(jnp.logical_and(eq, valid[None]),
                        jnp.where(valid, ce_pix, 0.0),
                        jnp.where(valid[None], p_pow, 0.0))
    else:
        _accumulate(eq, ce_pix, p_pow)


def combined_loss(outputs, targets, *, smooth=1e-6, gamma=2, contrib_ratio=0.5,
                  tile_pixels=65536):
    """outputs: [N, C, H, W] float (any dtype); targets: [N, H, W] int -> scalar."""
    assert gamma > 0, "onehot**gamma == onehot shortcut requires gamma > 0"
    N, C, H, W = outputs.shape
    HW = H * W
    total_pixels = N * HW
    itemsize = jnp.dtype(outputs.dtype).itemsize

    # ----- generation-aware VMEM budget -> pixel-tile size (rows of 128) -----
    try:
        vmem_cap = int(getattr(pltpu.get_tpu_info(), "vmem_capacity_bytes",
                               64 * 1024 * 1024))
    except Exception:
        vmem_cap = 64 * 1024 * 1024            # conservative (v7x per-TC)
    budget = int(vmem_cap * 0.55)
    # double-buffered logits+targets input + in-kernel f32 temporaries per row
    bytes_per_row = _LANES * (2 * (C * itemsize + 4) + (6 * C + 6) * 4)
    max_rows = max(_SUBLANES, (budget // bytes_per_row) // _SUBLANES * _SUBLANES)
    target_rows = max(_SUBLANES, tile_pixels // _LANES)
    cap_rows = min(max_rows, target_rows)

    s_total_raw = pl.cdiv(HW, _LANES)
    if s_total_raw <= cap_rows:
        s_tile, num_tiles = s_total_raw, 1      # one tile per image
    else:
        # Prefer a tile that divides the row count evenly (no wrapper-side pad
        # copy); fall back to largest aligned tile + masked tail otherwise.
        s_tile = None
        for cand in range(cap_rows // _SUBLANES * _SUBLANES, 0, -_SUBLANES):
            if s_total_raw % cand == 0:
                s_tile = cand
                break
        if s_tile is None or s_tile < max(_SUBLANES, cap_rows // 4):
            s_tile = max(_SUBLANES, cap_rows // _SUBLANES * _SUBLANES)
        num_tiles = pl.cdiv(s_total_raw, s_tile)
    s_total = num_tiles * s_tile
    needs_pad = (s_total * _LANES != HW)
    needs_mask = needs_pad

    # v7x dual-TensorCore: when the batch axis can't shard (N == 1), split the
    # pixel-tile reduction into two parallel chunks with separate partials.
    if N == 1 and num_tiles >= 2 and num_tiles % 2 == 0:
        num_chunks, tiles_per_chunk = 2, num_tiles // 2
    else:
        num_chunks, tiles_per_chunk = 1, num_tiles

    # ----- layout: free reshapes, native dtype, pixels on sublanes+lanes -----
    logits = outputs.reshape(N, C, HW)
    tgt = targets.reshape(N, HW).astype(jnp.int32)
    if needs_pad:
        # Only hit when HW % 128 != 0 or no reasonable divisor tile exists
        # (materializes one padded HBM copy; zero-pad keeps softmax finite so
        # masking after exp is safe).
        pad = s_total * _LANES - HW
        logits = jnp.pad(logits, ((0, 0), (0, 0), (0, pad)))
        tgt = jnp.pad(tgt, ((0, 0), (0, pad)))
    logits = logits.reshape(N, C, s_total, _LANES)
    tgt = tgt.reshape(N, s_total, _LANES)

    kernel = functools.partial(
        _combined_loss_kernel, hw=HW, s_tile=s_tile,
        tiles_per_chunk=tiles_per_chunk, num_tiles=num_tiles, gamma=gamma,
        needs_mask=needs_mask)

    G = num_chunks * N
    out_shape = (
        jax.ShapeDtypeStruct((G, 1, _LANES), jnp.float32),   # CE partial sums
        jax.ShapeDtypeStruct((G, C, _LANES), jnp.float32),   # intersection
        jax.ShapeDtypeStruct((G, C, _LANES), jnp.float32),   # sum(prob**gamma)
        jax.ShapeDtypeStruct((G, C, _LANES), jnp.float32),   # sum(onehot)
    )

    lhs_map = lambda c, n, i, tpc=tiles_per_chunk: (n, 0, c * tpc + i, 0)
    tgt_map = lambda c, n, i, tpc=tiles_per_chunk: (n, c * tpc + i, 0)
    out_map = lambda c, n, i, nb=N: (c * nb + n, 0, 0)

    # Generation-aware scoped-VMEM limit (only raised when tiles need it).
    est = (2 * s_tile * _LANES * (C * itemsize + 4)
           + (6 * C + 6) * s_tile * _LANES * 4
           + 8 * (3 * C + 1) * _LANES * 4)
    cp_kwargs = dict(dimension_semantics=("parallel", "parallel", "arbitrary"))
    if est > 8 * 1024 * 1024:
        cp_kwargs["vmem_limit_bytes"] = int(min(est * 2, vmem_cap * 0.85))

    ce_p, inter_p, p2_p, t_p = pl.pallas_call(
        kernel,
        out_shape=out_shape,
        grid_spec=pltpu.PrefetchScalarGridSpec(
            num_scalar_prefetch=0,
            grid=(num_chunks, N, tiles_per_chunk),
            in_specs=[
                pl.BlockSpec((None, C, s_tile, _LANES), lhs_map),
                pl.BlockSpec((None, s_tile, _LANES), tgt_map),
            ],
            out_specs=[
                pl.BlockSpec((None, 1, _LANES), out_map),
                pl.BlockSpec((None, C, _LANES), out_map),
                pl.BlockSpec((None, C, _LANES), out_map),
                pl.BlockSpec((None, C, _LANES), out_map),
            ],
        ),
        compiler_params=pltpu.CompilerParams(**cp_kwargs),
    )(logits, tgt)

    # Tiny final reductions (a few hundred floats) done in plain JAX.
    ce = jnp.sum(ce_p) / jnp.float32(total_pixels)
    inter = jnp.sum(inter_p, axis=(0, 2))           # (C,)
    p_pow_sum = jnp.sum(p2_p, axis=(0, 2))          # (C,)
    t_sum = jnp.sum(t_p, axis=(0, 2))               # (C,)
    dice_scores = (2.0 * inter + smooth) / (p_pow_sum + t_sum + smooth)
    dice_loss = 1.0 - jnp.mean(dice_scores)
    return contrib_ratio * ce + (1.0 - contrib_ratio) * dice_loss


def _reference_combined_loss(outputs, targets, smooth=1e-6, gamma=2,
                             contrib_ratio=0.5):
    """Pure-JAX reference matching the PyTorch module."""
    N, C, H, W = outputs.shape
    logits = outputs.astype(jnp.float32)
    lse = jax.nn.logsumexp(logits, axis=1)                       # (N, H, W)
    true_logit = jnp.take_along_axis(
        logits, targets[:, None, :, :].astype(jnp.int32), axis=1)[:, 0]
    ce = jnp.mean(lse - true_logit)
    probs = jax.nn.softmax(logits, axis=1)
    onehot = (targets[:, None, :, :] ==
              jnp.arange(C)[None, :, None, None]).astype(jnp.float32)
    inter = jnp.sum(probs * onehot, axis=(0, 2, 3))
    union = jnp.sum(probs ** gamma, axis=(0, 2, 3)) + jnp.sum(onehot ** gamma,
                                                              axis=(0, 2, 3))
    dice_scores = (2.0 * inter + smooth) / (union + smooth)
    dice_loss = 1.0 - jnp.mean(dice_scores)
    return contrib_ratio * ce + (1 - contrib_ratio) * dice_loss


if __name__ == "__main__":
    key = jax.random.PRNGKey(0)
    k1, k2, k3, k4, k5, k6 = jax.random.split(key, 6)

    # CE and the Dice intersection are exact; only probs**gamma uses the EUP
    # approximate reciprocal, so 2e-3 absolute tolerance is comfortable.
    TOL = 2e-3

    # Primary demo shape (single tile per image).
    N, C, H, W = 2, 4, 16, 16
    outputs = jax.random.normal(k1, (N, C, H, W), dtype=jnp.float32)
    targets = jax.random.randint(k2, (N, H, W), 0, C, dtype=jnp.int32)
    loss = jax.block_until_ready(combined_loss(outputs, targets))
    ref = jax.block_until_ready(_reference_combined_loss(outputs, targets))
    assert abs(float(loss) - float(ref)) < TOL, (float(loss), float(ref))

    # Multi-tile + padded/masked last-tile path (tile doesn't divide rows).
    N2, C2, H2, W2 = 2, 4, 48, 48
    outputs2 = jax.random.normal(k3, (N2, C2, H2, W2), dtype=jnp.float32)
    targets2 = jax.random.randint(k4, (N2, H2, W2), 0, C2, dtype=jnp.int32)
    loss2 = jax.block_until_ready(
        combined_loss(outputs2, targets2, tile_pixels=1024))
    ref2 = jax.block_until_ready(_reference_combined_loss(outputs2, targets2))
    assert abs(float(loss2) - float(ref2)) < TOL, (float(loss2), float(ref2))

    # N == 1 dual-chunk (v7x two-TensorCore) path, non-power-of-2 class count.
    N3, C3, H3, W3 = 1, 3, 64, 64
    outputs3 = jax.random.normal(k5, (N3, C3, H3, W3), dtype=jnp.float32)
    targets3 = jax.random.randint(k6, (N3, H3, W3), 0, C3, dtype=jnp.int32)
    loss3 = jax.block_until_ready(
        combined_loss(outputs3, targets3, tile_pixels=2048))
    ref3 = jax.block_until_ready(_reference_combined_loss(outputs3, targets3))
    assert abs(float(loss3) - float(ref3)) < TOL, (float(loss3), float(ref3))

    print("KERNEL_OK")
</pallas_src>

<mosaic_0001>
module attributes {stable_mosaic.version = 11 : i64} {
  func.func @_combined_loss_kernel(%arg0: i32, %arg1: i32, %arg2: i32, %arg3: memref<1x4x2x128xf32, #tpu.memory_space<vmem>>, %arg4: memref<1x2x128xi32, #tpu.memory_space<vmem>>, %arg5: memref<1x1x128xf32, #tpu.memory_space<vmem>>, %arg6: memref<1x4x128xf32, #tpu.memory_space<vmem>>, %arg7: memref<1x4x128xf32, #tpu.memory_space<vmem>>, %arg8: memref<1x4x128xf32, #tpu.memory_space<vmem>>) attributes {dimension_semantics = [#tpu.dimension_semantics<parallel>, #tpu.dimension_semantics<parallel>, #tpu.dimension_semantics<arbitrary>], iteration_bounds = array<i64: 1, 2, 1>, scalar_prefetch = 0 : i64, scratch_operands = 0 : i64, tpu.core_type = #tpu.core_type<tc>, window_params = [{transform_indices = @transform_0, window_bounds = array<i64: 1, 4, 2, 128>}, {transform_indices = @transform_1, window_bounds = array<i64: 1, 2, 128>}, {transform_indices = @transform_2, window_bounds = array<i64: 1, 1, 128>}, {transform_indices = @transform_3, window_bounds = array<i64: 1, 4, 128>}, {transform_indices = @transform_4, window_bounds = array<i64: 1, 4, 128>}, {transform_indices = @transform_5, window_bounds = array<i64: 1, 4, 128>}]} {
    %c0_i32 = arith.constant 0 : i32
    %0 = arith.cmpi eq, %arg2, %c0_i32 : i32
    %1 = arith.extui %0 : i1 to i32
    %c0_i32_0 = arith.constant 0 : i32
    %2 = arith.cmpi ne, %1, %c0_i32_0 : i32
    scf.if %2 {
      %cst_42 = arith.constant 0.000000e+00 : f32
      %70 = vector.broadcast %cst_42 : f32 to vector<1x128xf32>
      %c0_43 = arith.constant 0 : index
      %c0_44 = arith.constant 0 : index
      %c0_45 = arith.constant 0 : index
      %71 = vector.load %arg5[%c0_43, %c0_44, %c0_45] : memref<1x1x128xf32, #tpu.memory_space<vmem>>, vector<1x1x128xf32>
      %72 = vector.shape_cast %71 : vector<1x1x128xf32> to vector<1x128xf32>
      %73 = vector.shape_cast %70 : vector<1x128xf32> to vector<1x1x128xf32>
      tpu.vector_store %arg5[%c0_43, %c0_44, %c0_45], %73 {strides = array<i32>} : memref<1x1x128xf32, #tpu.memory_space<vmem>>, vector<1x1x128xf32>,
      %cst_46 = arith.constant 0.000000e+00 : f32
      %74 = vector.broadcast %cst_46 : f32 to vector<4x128xf32>
      %c0_47 = arith.constant 0 : index
      %c0_48 = arith.constant 0 : index
      %c0_49 = arith.constant 0 : index
      %75 = vector.load %arg6[%c0_47, %c0_48, %c0_49] : memref<1x4x128xf32, #tpu.memory_space<vmem>>, vector<1x4x128xf32>
      %76 = vector.shape_cast %75 : vector<1x4x128xf32> to vector<4x128xf32>
      %77 = vector.shape_cast %74 : vector<4x128xf32> to vector<1x4x128xf32>
      tpu.vector_store %arg6[%c0_47, %c0_48, %c0_49], %77 {strides = array<i32>} : memref<1x4x128xf32, #tpu.memory_space<vmem>>, vector<1x4x128xf32>,
      %cst_50 = arith.constant 0.000000e+00 : f32
      %78 = vector.broadcast %cst_50 : f32 to vector<4x128xf32>
      %c0_51 = arith.constant 0 : index
      %c0_52 = arith.constant 0 : index
      %c0_53 = arith.constant 0 : index
      %79 = vector.load %arg7[%c0_51, %c0_52, %c0_53] : memref<1x4x128xf32, #tpu.memory_space<vmem>>, vector<1x4x128xf32>
      %80 = vector.shape_cast %79 : vector<1x4x128xf32> to vector<4x128xf32>
      %81 = vector.shape_cast %78 : vector<4x128xf32> to vector<1x4x128xf32>
      tpu.vector_store %arg7[%c0_51, %c0_52, %c0_53], %81 {strides = array<i32>} : memref<1x4x128xf32, #tpu.memory_space<vmem>>, vector<1x4x128xf32>,
      %cst_54 = arith.constant 0.000000e+00 : f32
      %82 = vector.broadcast %cst_54 : f32 to vector<4x128xf32>
      %c0_55 = arith.constant 0 : index
      %c0_56 = arith.constant 0 : index
      %c0_57 = arith.constant 0 : index
      %83 = vector.load %arg8[%c0_55, %c0_56, %c0_57] : memref<1x4x128xf32, #tpu.memory_space<vmem>>, vector<1x4x128xf32>
      %84 = vector.shape_cast %83 : vector<1x4x128xf32> to vector<4x128xf32>
      %85 = vector.shape_cast %82 : vector<4x128xf32> to vector<1x4x128xf32>
      tpu.vector_store %arg8[%c0_55, %c0_56, %c0_57], %85 {strides = array<i32>} : memref<1x4x128xf32, #tpu.memory_space<vmem>>, vector<1x4x128xf32>,
    } else {
    }
    %c0 = arith.constant 0 : index
    %c0_1 = arith.constant 0 : index
    %c0_2 = arith.constant 0 : index
    %c0_3 = arith.constant 0 : index
    %3 = vector.load %arg3[%c0, %c0_1, %c0_2, %c0_3] : memref<1x4x2x128xf32, #tpu.memory_space<vmem>>, vector<1x4x2x128xf32>
    %4 = vector.shape_cast %3 : vector<1x4x2x128xf32> to vector<4x2x128xf32>
    %c0_4 = arith.constant 0 : index
    %c0_5 = arith.constant 0 : index
    %c0_6 = arith.constant 0 : index
    %5 = vector.load %arg4[%c0_4, %c0_5, %c0_6] : memref<1x2x128xi32, #tpu.memory_space<vmem>>, vector<1x2x128xi32>
    %6 = vector.shape_cast %5 : vector<1x2x128xi32> to vector<2x128xi32>
    %cst = arith.constant dense<0xFF800000> : vector<2x128xf32>
    %7 = vector.multi_reduction <maximumf>, %4, %cst [0] : vector<4x2x128xf32> to vector<2x128xf32>
    %8 = vector.shape_cast %7 : vector<2x128xf32> to vector<1x2x128xf32>
    %9 = vector.broadcast %8 : vector<1x2x128xf32> to vector<4x2x128xf32>
    %10 = arith.subf %4, %9 : vector<4x2x128xf32>
    %11 = math.exp %10 : vector<4x2x128xf32>
    %cst_7 = arith.constant dense<0.000000e+00> : vector<2x128xf32>
    %12 = vector.multi_reduction <add>, %11, %cst_7 [0] : vector<4x2x128xf32> to vector<2x128xf32>
    %13 = vector.shape_cast %12 : vector<2x128xf32> to vector<1x2x128xf32>
    %14 = tpu.reciprocal %13 {approx = true} : vector<1x2x128xf32> -> vector<1x2x128xf32>
    %15 = vector.broadcast %14 : vector<1x2x128xf32> to vector<4x2x128xf32>
    %16 = arith.mulf %11, %15 : vector<4x2x128xf32>
    %17 = vector.shape_cast %8 : vector<1x2x128xf32> to vector<2x128xf32>
    %18 = vector.shape_cast %13 : vector<1x2x128xf32> to vector<2x128xf32>
    %19 = math.log %18 : vector<2x128xf32>
    %20 = arith.addf %17, %19 : vector<2x128xf32>
    %21 = tpu.iota {dimensions = array<i32: 0>} : vector<4x2x128xi32>
    %22 = vector.shape_cast %6 : vector<2x128xi32> to vector<1x2x128xi32>
    %23 = vector.broadcast %22 : vector<1x2x128xi32> to vector<4x2x128xi32>
    %24 = arith.cmpi eq, %21, %23 : vector<4x2x128xi32>
    %cst_8 = arith.constant 0.000000e+00 : f32
    %25 = vector.broadcast %cst_8 : f32 to vector<4x2x128xf32>
    %26 = arith.select %24, %4, %25 : vector<4x2x128xi1>, vector<4x2x128xf32>
    %cst_9 = arith.constant dense<0.000000e+00> : vector<2x128xf32>
    %27 = vector.multi_reduction <add>, %26, %cst_9 [0] : vector<4x2x128xf32> to vector<2x128xf32>
    %28 = arith.subf %20, %27 : vector<2x128xf32>
    %cst_10 = arith.constant 0.000000e+00 : f32
    %29 = vector.broadcast %cst_10 : f32 to vector<2x128xf32>
    %30 = arith.subf %29, %28 : vector<2x128xf32>
    %31 = math.exp %30 : vector<2x128xf32>
    %32 = arith.mulf %16, %16 : vector<4x2x128xf32>
    %c0_11 = arith.constant 0 : index
    %c0_12 = arith.constant 0 : index
    %c0_13 = arith.constant 0 : index
    %33 = vector.load %arg5[%c0_11, %c0_12, %c0_13] : memref<1x1x128xf32, #tpu.memory_space<vmem>>, vector<1x1x128xf32>
    %34 = vector.shape_cast %33 : vector<1x1x128xf32> to vector<1x128xf32>
    %cst_14 = arith.constant dense<0.000000e+00> : vector<128xf32>
    %35 = vector.multi_reduction <add>, %28, %cst_14 [0] : vector<2x128xf32> to vector<128xf32>
    %36 = vector.shape_cast %35 : vector<128xf32> to vector<1x128xf32>
    %37 = arith.addf %34, %36 : vector<1x128xf32>
    %c0_15 = arith.constant 0 : index
    %c0_16 = arith.constant 0 : index
    %c0_17 = arith.constant 0 : index
    %38 = vector.load %arg5[%c0_15, %c0_16, %c0_17] : memref<1x1x128xf32, #tpu.memory_space<vmem>>, vector<1x1x128xf32>
    %39 = vector.shape_cast %38 : vector<1x1x128xf32> to vector<1x128xf32>
    %40 = vector.shape_cast %37 : vector<1x128xf32> to vector<1x1x128xf32>
    tpu.vector_store %arg5[%c0_15, %c0_16, %c0_17], %40 {strides = array<i32>} : memref<1x1x128xf32, #tpu.memory_space<vmem>>, vector<1x1x128xf32>,
    %c0_18 = arith.constant 0 : index
    %c0_19 = arith.constant 0 : index
    %c0_20 = arith.constant 0 : index
    %41 = vector.load %arg6[%c0_18, %c0_19, %c0_20] : memref<1x4x128xf32, #tpu.memory_space<vmem>>, vector<1x4x128xf32>
    %42 = vector.shape_cast %41 : vector<1x4x128xf32> to vector<4x128xf32>
    %43 = vector.shape_cast %31 : vector<2x128xf32> to vector<1x2x128xf32>
    %cst_21 = arith.constant 0.000000e+00 : f32
    %44 = vector.shape_cast %43 : vector<1x2x128xf32> to vector<1x2x128xf32>
    %45 = vector.broadcast %44 : vector<1x2x128xf32> to vector<4x2x128xf32>
    %46 = vector.broadcast %cst_21 : f32 to vector<4x2x128xf32>
    %47 = arith.select %24, %45, %46 : vector<4x2x128xi1>, vector<4x2x128xf32>
    %cst_22 = arith.constant dense<0.000000e+00> : vector<4x128xf32>
    %48 = vector.multi_reduction <add>, %47, %cst_22 [1] : vector<4x2x128xf32> to vector<4x128xf32>
    %49 = arith.addf %42, %48 : vector<4x128xf32>
    %c0_23 = arith.constant 0 : index
    %c0_24 = arith.constant 0 : index
    %c0_25 = arith.constant 0 : index
    %50 = vector.load %arg6[%c0_23, %c0_24, %c0_25] : memref<1x4x128xf32, #tpu.memory_space<vmem>>, vector<1x4x128xf32>
    %51 = vector.shape_cast %50 : vector<1x4x128xf32> to vector<4x128xf32>
    %52 = vector.shape_cast %49 : vector<4x128xf32> to vector<1x4x128xf32>
    tpu.vector_store %arg6[%c0_23, %c0_24, %c0_25], %52 {strides = array<i32>} : memref<1x4x128xf32, #tpu.memory_space<vmem>>, vector<1x4x128xf32>,
    %c0_26 = arith.constant 0 : index
    %c0_27 = arith.constant 0 : index
    %c0_28 = arith.constant 0 : index
    %53 = vector.load %arg7[%c0_26, %c0_27, %c0_28] : memref<1x4x128xf32, #tpu.memory_space<vmem>>, vector<1x4x128xf32>
    %54 = vector.shape_cast %53 : vector<1x4x128xf32> to vector<4x128xf32>
    %cst_29 = arith.constant dense<0.000000e+00> : vector<4x128xf32>
    %55 = vector.multi_reduction <add>, %32, %cst_29 [1] : vector<4x2x128xf32> to vector<4x128xf32>
    %56 = arith.addf %54, %55 : vector<4x128xf32>
    %c0_30 = arith.constant 0 : index
    %c0_31 = arith.constant 0 : index
    %c0_32 = arith.constant 0 : index
    %57 = vector.load %arg7[%c0_30, %c0_31, %c0_32] : memref<1x4x128xf32, #tpu.memory_space<vmem>>, vector<1x4x128xf32>
    %58 = vector.shape_cast %57 : vector<1x4x128xf32> to vector<4x128xf32>
    %59 = vector.shape_cast %56 : vector<4x128xf32> to vector<1x4x128xf32>
    tpu.vector_store %arg7[%c0_30, %c0_31, %c0_32], %59 {strides = array<i32>} : memref<1x4x128xf32, #tpu.memory_space<vmem>>, vector<1x4x128xf32>,
    %c0_33 = arith.constant 0 : index
    %c0_34 = arith.constant 0 : index
    %c0_35 = arith.constant 0 : index
    %60 = vector.load %arg8[%c0_33, %c0_34, %c0_35] : memref<1x4x128xf32, #tpu.memory_space<vmem>>, vector<1x4x128xf32>
    %61 = vector.shape_cast %60 : vector<1x4x128xf32> to vector<4x128xf32>
    %cst_36 = arith.constant 1.000000e+00 : f32
    %cst_37 = arith.constant 0.000000e+00 : f32
    %62 = vector.broadcast %cst_36 : f32 to vector<4x2x128xf32>
    %63 = vector.broadcast %cst_37 : f32 to vector<4x2x128xf32>
    %64 = arith.select %24, %62, %63 : vector<4x2x128xi1>, vector<4x2x128xf32>
    %cst_38 = arith.constant dense<0.000000e+00> : vector<4x128xf32>
    %65 = vector.multi_reduction <add>, %64, %cst_38 [1] : vector<4x2x128xf32> to vector<4x128xf32>
    %66 = arith.addf %61, %65 : vector<4x128xf32>
    %c0_39 = arith.constant 0 : index
    %c0_40 = arith.constant 0 : index
    %c0_41 = arith.constant 0 : index
    %67 = vector.load %arg8[%c0_39, %c0_40, %c0_41] : memref<1x4x128xf32, #tpu.memory_space<vmem>>, vector<1x4x128xf32>
    %68 = vector.shape_cast %67 : vector<1x4x128xf32> to vector<4x128xf32>
    %69 = vector.shape_cast %66 : vector<4x128xf32> to vector<1x4x128xf32>
    tpu.vector_store %arg8[%c0_39, %c0_40, %c0_41], %69 {strides = array<i32>} : memref<1x4x128xf32, #tpu.memory_space<vmem>>, vector<1x4x128xf32>,
    return
  }
  func.func @transform_0(%arg0: i32, %arg1: i32, %arg2: i32) -> (i32, i32, i32, i32) {
    %c1_i32 = arith.constant 1 : i32
    %0 = arith.muli %arg0, %c1_i32 : i32
    %1 = arith.addi %0, %arg2 : i32
    %c0_i32 = arith.constant 0 : i32
    %c0_i32_0 = arith.constant 0 : i32
    %c0_i32_1 = arith.constant 0 : i32
    return %arg1, %c0_i32, %1, %c0_i32_0 : i32, i32, i32, i32
  }
  func.func @transform_1(%arg0: i32, %arg1: i32, %arg2: i32) -> (i32, i32, i32) {
    %c1_i32 = arith.constant 1 : i32
    %0 = arith.muli %arg0, %c1_i32 : i32
    %1 = arith.addi %0, %arg2 : i32
    %c0_i32 = arith.constant 0 : i32
    %c0_i32_0 = arith.constant 0 : i32
    return %arg1, %1, %c0_i32 : i32, i32, i32
  }
  func.func @transform_2(%arg0: i32, %arg1: i32, %arg2: i32) -> (i32, i32, i32) {
    %c2_i32 = arith.constant 2 : i32
    %0 = arith.muli %arg0, %c2_i32 : i32
    %1 = arith.addi %0, %arg1 : i32
    %c0_i32 = arith.constant 0 : i32
    %c0_i32_0 = arith.constant 0 : i32
    %c0_i32_1 = arith.constant 0 : i32
    return %1, %c0_i32, %c0_i32_0 : i32, i32, i32
  }
  func.func @transform_3(%arg0: i32, %arg1: i32, %arg2: i32) -> (i32, i32, i32) {
    %c2_i32 = arith.constant 2 : i32
    %0 = arith.muli %arg0, %c2_i32 : i32
    %1 = arith.addi %0, %arg1 : i32
    %c0_i32 = arith.constant 0 : i32
    %c0_i32_0 = arith.constant 0 : i32
    %c0_i32_1 = arith.constant 0 : i32
    return %1, %c0_i32, %c0_i32_0 : i32, i32, i32
  }
  func.func @transform_4(%arg0: i32, %arg1: i32, %arg2: i32) -> (i32, i32, i32) {
    %c2_i32 = arith.constant 2 : i32
    %0 = arith.muli %arg0, %c2_i32 : i32
    %1 = arith.addi %0, %arg1 : i32
    %c0_i32 = arith.constant 0 : i32
    %c0_i32_0 = arith.constant 0 : i32
    %c0_i32_1 = arith.constant 0 : i32
    return %1, %c0_i32, %c0_i32_0 : i32, i32, i32
  }
  func.func @transform_5(%arg0: i32, %arg1: i32, %arg2: i32) -> (i32, i32, i32) {
    %c2_i32 = arith.constant 2 : i32
    %0 = arith.muli %arg0, %c2_i32 : i32
    %1 = arith.addi %0, %arg1 : i32
    %c0_i32 = arith.constant 0 : i32
    %c0_i32_0 = arith.constant 0 : i32
    %c0_i32_1 = arith.constant 0 : i32
    return %1, %c0_i32, %c0_i32_0 : i32, i32, i32
  }
}

</mosaic_0001>

<llo_original>
// kernel: tpu_custom_call.1
$region0: #{tpu_custom_call.1}
  #allocation0 [shape = 'u32[]', space=smem, size = 0x4, offset = 0x4, fixed_abs, tag = 'smem constant byte address 0x4 - core index']
  #allocation1 [shape = 'u32[144,128]{1,0:T(1,128)}', space=vmem, size = 0x12000, scoped, tag = 'internal scratch']
  %s0 = inlined_call_operand.hbm [shape: f32[2,4,2,128], index: 0, kind: input, shape index: {}]
  %s1 = inlined_call_operand.hbm [shape: s32[2,2,128], index: 1, kind: input, shape index: {}]
  %s2 = inlined_call_operand.hbm [shape: f32[2,1,128], index: 2, kind: output, shape index: {0}]
  %s3 = inlined_call_operand.hbm [shape: f32[2,4,128], index: 3, kind: output, shape index: {1}]
  %s4 = inlined_call_operand.hbm [shape: f32[2,4,128], index: 4, kind: output, shape index: {2}]
  %s5 = inlined_call_operand.hbm [shape: f32[2,4,128], index: 5, kind: output, shape index: {3}]
  %6 = xla_tuple %s2, %s3, %s4, %s5
  %s7 = sld [smem:[#allocation0]]
  $region77: #{tpu_custom_call.1} parent=0
    _
  %s9 = ssub.s32 1, %s7
  %s10 = scalar_select 0, %s9, %s7
  $region1: #{tpu_custom_call.1} parent=0
    #allocation2 [shape = 'u8[8192]{0}', space=vmem, size = 0x2000, scoped, tag = 'input window, operand 0']
    #allocation3 [shape = 's32[2]{0}', space=sflag, size = 0x8, scoped, tag = 'scoped memory for tpu_custom_call.1']
    #allocation4 [shape = 's32[2]{0}', space=sflag, size = 0x8, scoped, tag = 'scoped memory for tpu_custom_call.1']
    #allocation5 [shape = 'u8[2048]{0}', space=vmem, size = 0x800, scoped, tag = 'input window, operand 1']
    #allocation6 [shape = 's32[2]{0}', space=sflag, size = 0x8, scoped, tag = 'scoped memory for tpu_custom_call.1']
    #allocation7 [shape = 'u8[1024]{0}', space=vmem, size = 0x400, scoped, tag = 'output window, operand 0']
    #allocation8 [shape = 'u8[4096]{0}', space=vmem, size = 0x1000, scoped, tag = 'output window, operand 1']
    #allocation9 [shape = 's32[2]{0}', space=sflag, size = 0x8, scoped, tag = 'scoped memory for tpu_custom_call.1']
    #allocation10 [shape = 'u8[4096]{0}', space=vmem, size = 0x1000, scoped, tag = 'output window, operand 2']
    #allocation11 [shape = 'u8[4096]{0}', space=vmem, size = 0x1000, scoped, tag = 'output window, operand 3']
    #allocation12 [shape = 's32[2]{0}', space=sflag, size = 0x8, scoped, tag = 'scoped memory for tpu_custom_call.1']
    %11 = vsyncpa [#allocation3], 0
    %s12 = scalar_lea.sflag [#allocation3], 1
    %13 = vsyncpa %s12, 0
    %14 = vsyncpa [#allocation6], 0
    %s15 = scalar_lea.sflag [#allocation6], 1
    %16 = vsyncpa %s15, 0
    %17 = vsyncpa [#allocation4], 0
    %s18 = scalar_lea.sflag [#allocation4], 1
    %19 = vsyncpa %s18, 0
    %20 = vsyncpa [#allocation9], 0
    %s21 = scalar_lea.sflag [#allocation9], 1
    %22 = vsyncpa %s21, 0
    %23 = vsyncpa [#allocation12], 0
    %s24 = scalar_lea.sflag [#allocation12], 1
    %25 = vsyncpa %s24, 0
    loop: start=0, step=1, limit=4
    $region2: #{tpu_custom_call.1} parent=1 // loop_pre_header
      _
    $region3: #{tpu_custom_call.1} parent=1 // loop_header
      %s27 = sphi 0, %s31
      %p28 = scmp.ge.s32.totalorder %s27, 4
      %s34 = sphi 0, %s53
      %s35 = sphi 0, %s49
      %s36 = sphi 0, %s45
      %s37 = sphi 0, %s34
      %s38 = sphi 0, %s35
      %s39 = sphi 0, %s36
      %s40 = sphi 0, %s37
      %s41 = sphi 0, %s38
      %s42 = sphi 0, %s39
      %s60 = sphi 0, %s62
      %s63 = sphi 0, %s60
      %s64 = sphi 0, %s63
      %s80 = sphi 0, %s64
      %s90 = sphi 0, %s92
      %s93 = sphi 0, %s90
      %s94 = sphi 0, %s93
      %s110 = sphi 0, %s94
      %s120 = sphi 0, %s122
      %s123 = sphi 0, %s120
      %s124 = sphi 0, %s123
      %s140 = sphi 0, %s124
      %s150 = sphi 0, %s152
      %s153 = sphi 0, %s150
      %s154 = sphi 0, %s153
      %s170 = sphi 0, %s154
      %s180 = sphi 0, %s182
      %s183 = sphi 0, %s180
      %s184 = sphi 0, %s183
      %s200 = sphi 0, %s184
      %s210 = sphi 0, %s212
      %s213 = sphi 0, %s210
      %s214 = sphi 0, %s213
      %s230 = sphi 0, %s214
    $region4: #{tpu_custom_call.1} parent=1 // loop_header_branch
      %30 = sbr.rel (%p28) target = $region8
    $region5: #{tpu_custom_call.1} parent=1 // loop_body
      %s32 = ssub.s32 %s27, 1
      %s33 = ssub.s32 %s27, 2
      %s43 = sadd.s32 1, %s36
      %p44 = scmp.ge.s32.totalorder %s43, 1
      %s45 = scalar_select %p44, 0, %s43
      %s46 = sadd.s32 1, %s35
      %s47 = scalar_select %p44, %s46, %s35
      %p48 = scmp.ge.s32.totalorder %s47, 2
      %s49 = scalar_select %p48, 0, %s47
      %s50 = sadd.s32 1, %s34
      %s51 = scalar_select %p48, %s50, %s34
      %p52 = scmp.ge.s32.totalorder %s51, 1
      %s53 = scalar_select %p52, 0, %s51
      %s54 = sadd.s32 %s34, %s36
      %s55 = sadd.s32 %s53, %s45
      %s56 = ssub.s32 %s35, %s49
      %s57 = ssub.s32 %s54, %s55
      %s58 = sor.u32 %s56, %s57
      %p59 = scmp.eq.s32.totalorder %s58, 0
      %s61 = sadd.s32 %s60, 1
      %s62 = scalar_select %p59, %s60, %s61
      %p65 = pneg %p59
      %p66 = scmp.eq.s32.totalorder %s27, 1
      %p67 = por %p65, %p66
      %p68 = scmp.ne.s32.totalorder %s60, %s63
      %p69 = scmp.eq.s32.totalorder %s27, 0
      %p70 = por %p68, %p69
      %p71 = scmp.ne.s32.totalorder %s60, %s63
      %p72 = scmp.eq.s32.totalorder %s32, 1
      %p73 = por %p71, %p72
      %p74 = scmp.ne.s32.totalorder %s63, %s64
      %p75 = scmp.eq.s32.totalorder %s32, 0
      %p76 = por %p74, %p75
      %p77 = scmp.ne.s32.totalorder %s63, %s64
      %p78 = scmp.eq.s32.totalorder %s33, 1
      %p79 = por %p77, %p78
      %p81 = scmp.ne.s32.totalorder %s64, %s80
      %p82 = scmp.eq.s32.totalorder %s33, 0
      %p83 = por %p81, %p82
      %s84 = sadd.s32 %s34, %s36
      %s85 = sadd.s32 %s53, %s45
      %s86 = ssub.s32 %s35, %s49
      %s87 = ssub.s32 %s84, %s85
      %s88 = sor.u32 %s86, %s87
      %p89 = scmp.eq.s32.totalorder %s88, 0
      %s91 = sadd.s32 %s90, 1
      %s92 = scalar_select %p89, %s90, %s91
      %p95 = pneg %p89
      %p96 = scmp.eq.s32.totalorder %s27, 1
      %p97 = por %p95, %p96
      %p98 = scmp.ne.s32.totalorder %s90, %s93
      %p99 = scmp.eq.s32.totalorder %s27, 0
      %p100 = por %p98, %p99
      %p101 = scmp.ne.s32.totalorder %s90, %s93
      %p102 = scmp.eq.s32.totalorder %s32, 1
      %p103 = por %p101, %p102
      %p104 = scmp.ne.s32.totalorder %s93, %s94
      %p105 = scmp.eq.s32.totalorder %s32, 0
      %p106 = por %p104, %p105
      %p107 = scmp.ne.s32.totalorder %s93, %s94
      %p108 = scmp.eq.s32.totalorder %s33, 1
      %p109 = por %p107, %p108
      %p111 = scmp.ne.s32.totalorder %s94, %s110
      %p112 = scmp.eq.s32.totalorder %s33, 0
      %p113 = por %p111, %p112
      %s114 = smul.u32 %s34, 2
      %s115 = sadd.s32 %s114, %s35
      %s116 = smul.u32 %s53, 2
      %s117 = sadd.s32 %s116, %s49
      %s118 = ssub.s32 %s115, %s117
      %p119 = scmp.eq.s32.totalorder %s118, 0
      %s121 = sadd.s32 %s120, 1
      %s122 = scalar_select %p119, %s120, %s121
      %p125 = pneg %p119
      %p126 = scmp.eq.s32.totalorder %s27, 1
      %p127 = por %p125, %p126
      %p128 = scmp.ne.s32.totalorder %s120, %s123
      %p129 = scmp.eq.s32.totalorder %s27, 0
      %p130 = por %p128, %p129
      %p131 = scmp.ne.s32.totalorder %s120, %s123
      %p132 = scmp.eq.s32.totalorder %s32, 1
      %p133 = por %p131, %p132
      %p134 = scmp.ne.s32.totalorder %s123, %s124
      %p135 = scmp.eq.s32.totalorder %s32, 0
      %p136 = por %p134, %p135
      %p137 = scmp.ne.s32.totalorder %s123, %s124
      %p138 = scmp.eq.s32.totalorder %s33, 1
      %p139 = por %p137, %p138
      %p141 = scmp.ne.s32.totalorder %s124, %s140
      %p142 = scmp.eq.s32.totalorder %s33, 0
      %p143 = por %p141, %p142
      %s144 = smul.u32 %s34, 2
      %s145 = sadd.s32 %s144, %s35
      %s146 = smul.u32 %s53, 2
      %s147 = sadd.s32 %s146, %s49
      %s148 = ssub.s32 %s145, %s147
      %p149 = scmp.eq.s32.totalorder %s148, 0
      %s151 = sadd.s32 %s150, 1
      %s152 = scalar_select %p149, %s150, %s151
      %p155 = pneg %p149
      %p156 = scmp.eq.s32.totalorder %s27, 1
      %p157 = por %p155, %p156
      %p158 = scmp.ne.s32.totalorder %s150, %s153
      %p159 = scmp.eq.s32.totalorder %s27, 0
      %p160 = por %p158, %p159
      %p161 = scmp.ne.s32.totalorder %s150, %s153
      %p162 = scmp.eq.s32.totalorder %s32, 1
      %p163 = por %p161, %p162
      %p164 = scmp.ne.s32.totalorder %s153, %s154
      %p165 = scmp.eq.s32.totalorder %s32, 0
      %p166 = por %p164, %p165
      %p167 = scmp.ne.s32.totalorder %s153, %s154
      %p168 = scmp.eq.s32.totalorder %s33, 1
      %p169 = por %p167, %p168
      %p171 = scmp.ne.s32.totalorder %s154, %s170
      %p172 = scmp.eq.s32.totalorder %s33, 0
      %p173 = por %p171, %p172
      %s174 = smul.u32 %s34, 2
      %s175 = sadd.s32 %s174, %s35
      %s176 = smul.u32 %s53, 2
      %s177 = sadd.s32 %s176, %s49
      %s178 = ssub.s32 %s175, %s177
      %p179 = scmp.eq.s32.totalorder %s178, 0
      %s181 = sadd.s32 %s180, 1
      %s182 = scalar_select %p179, %s180, %s181
      %p185 = pneg %p179
      %p186 = scmp.eq.s32.totalorder %s27, 1
      %p187 = por %p185, %p186
      %p188 = scmp.ne.s32.totalorder %s180, %s183
      %p189 = scmp.eq.s32.totalorder %s27, 0
      %p190 = por %p188, %p189
      %p191 = scmp.ne.s32.totalorder %s180, %s183
      %p192 = scmp.eq.s32.totalorder %s32, 1
      %p193 = por %p191, %p192
      %p194 = scmp.ne.s32.totalorder %s183, %s184
      %p195 = scmp.eq.s32.totalorder %s32, 0
      %p196 = por %p194, %p195
      %p197 = scmp.ne.s32.totalorder %s183, %s184
      %p198 = scmp.eq.s32.totalorder %s33, 1
      %p199 = por %p197, %p198
      %p201 = scmp.ne.s32.totalorder %s184, %s200
      %p202 = scmp.eq.s32.totalorder %s33, 0
      %p203 = por %p201, %p202
      %s204 = smul.u32 %s34, 2
      %s205 = sadd.s32 %s204, %s35
      %s206 = smul.u32 %s53, 2
      %s207 = sadd.s32 %s206, %s49
      %s208 = ssub.s32 %s205, %s207
      %p209 = scmp.eq.s32.totalorder %s208, 0
      %s211 = sadd.s32 %s210, 1
      %s212 = scalar_select %p209, %s210, %s211
      %p215 = pneg %p209
      %p216 = scmp.eq.s32.totalorder %s27, 1
      %p217 = por %p215, %p216
      %p218 = scmp.ne.s32.totalorder %s210, %s213
      %p219 = scmp.eq.s32.totalorder %s27, 0
      %p220 = por %p218, %p219
      %p221 = scmp.ne.s32.totalorder %s210, %s213
      %p222 = scmp.eq.s32.totalorder %s32, 1
      %p223 = por %p221, %p222
      %p224 = scmp.ne.s32.totalorder %s213, %s214
      %p225 = scmp.eq.s32.totalorder %s32, 0
      %p226 = por %p224, %p225
      %p227 = scmp.ne.s32.totalorder %s213, %s214
      %p228 = scmp.eq.s32.totalorder %s33, 1
      %p229 = por %p227, %p228
      %p231 = scmp.ne.s32.totalorder %s214, %s230
      %p232 = scmp.eq.s32.totalorder %s33, 0
      %p233 = por %p231, %p232
      %p234 = scmp.le.s32.totalorder 1, %s27
      %p235 = scmp.lt.s32.totalorder %s27, 3
      %p236 = pnand %p234, %p235
      %p237 = pneg %p236
      // Predicated region
      $region9: #{tpu_custom_call.1} parent=5 // pred_check
        _
      $region10: #{tpu_custom_call.1} parent=5 // pred_check_branch
        %239 = sbr.rel (%p236) target = $region12
      $region11: #{tpu_custom_call.1} parent=5 // pred_region
        %s240 = ssub.s32 %s27, 1
      $region12: #{tpu_custom_call.1} parent=5 // pred_fallthru
        _
      %p241 = scmp.lt.s32.totalorder %s27, 2
      // Predicated region
      $region13: #{tpu_custom_call.1} parent=5 // pred_check
        %p242 = pneg %p241
      $region14: #{tpu_custom_call.1} parent=5 // pred_check_branch
        %244 = sbr.rel (%p242) target = $region16
      $region15: #{tpu_custom_call.1} parent=5 // pred_region
        // Predicated region
        $region17: #{tpu_custom_call.1} parent=15 // pred_check
          %p245 = pneg %p70
        $region18: #{tpu_custom_call.1} parent=15 // pred_check_branch
          %247 = sbr.rel (%p245) target = $region20
        $region19: #{tpu_custom_call.1} parent=15 // pred_region
          %s248 = sand.u32 %s60, 1
          %s249 = scalar_lea.sflag [#allocation3], %s248
          %s250 = sand.u32 %s60, 1
          %s251 = smul.addr %s250, 8
          %s252 = scalar_lea.vmem [#allocation2], %s251
          %s253 = sadd.s32 %s34, %s36
          %s255 = ssub.s32 128, 128
          %256 = vsyncadd %s249, %s255
          %s257 = smul.addr %s35, 4
          %s258 = sadd.s32 %s253, %s257
          %s259 = smul.addr %s258, 32
          %s260 = scalar_lea.hbm %s0, %s259
          %s261 = sshll.u32 %s252, 4
          %s262 = int_to_ptr.vmem [resolvable:$true] %s261
          %267 = dma.hbm_to_vmem [thread:$0]  %s260, 128, %s262, %s249, 32, 32, 2
        $region20: #{tpu_custom_call.1} parent=15 // pred_fallthru
          _
        // Predicated region
        $region21: #{tpu_custom_call.1} parent=15 // pred_check
          %p268 = pneg %p100
        $region22: #{tpu_custom_call.1} parent=15 // pred_check_branch
          %270 = sbr.rel (%p268) target = $region24
        $region23: #{tpu_custom_call.1} parent=15 // pred_region
          %s271 = sand.u32 %s90, 1
          %s272 = scalar_lea.sflag [#allocation6], %s271
          %s273 = sand.u32 %s90, 1
          %s274 = smul.addr %s273, 2
          %s275 = scalar_lea.vmem [#allocation5], %s274
          %s276 = sadd.s32 %s34, %s36
          %s278 = ssub.s32 32, 32
          %279 = vsyncadd %s272, %s278
          %s280 = sadd.s32 %s276, %s35
          %s281 = smul.addr %s280, 32
          %s282 = scalar_lea.hbm %s1, %s281
          %s284 = sshll.u32 %s275, 4
          %s285 = int_to_ptr.vmem [resolvable:$true] %s284
          %287 = dma.hbm_to_vmem [thread:$0]  %s282, 32, %s285, %s272
        $region24: #{tpu_custom_call.1} parent=15 // pred_fallthru
          _
      $region16: #{tpu_custom_call.1} parent=5 // pred_fallthru
        _
      %p288 = scmp.le.s32.totalorder 1, %s27
      %p289 = scmp.lt.s32.totalorder %s27, 3
      %p290 = pnand %p288, %p289
      %p291 = pneg %p290
      // Predicated region
      $region25: #{tpu_custom_call.1} parent=5 // pred_check
        _
      $region26: #{tpu_custom_call.1} parent=5 // pred_check_branch
        %293 = sbr.rel (%p290) target = $region28
      $region27: #{tpu_custom_call.1} parent=5 // pred_region
        %s294 = ssub.s32 %s27, 1
        %s295 = sand.u32 %s63, 1
        %s296 = scalar_lea.sflag [#allocation3], %s295
        %s297 = sand.u32 %s63, 1
        %s298 = smul.addr %s297, 8
        %s299 = scalar_lea.vmem [#allocation2], %s298
        // Predicated region
        $region29: #{tpu_custom_call.1} parent=27 // pred_check
          %p300 = pneg %p76
        $region30: #{tpu_custom_call.1} parent=27 // pred_check_branch
          %302 = sbr.rel (%p300) target = $region32
        $region31: #{tpu_custom_call.1} parent=27 // pred_region
          %303 = dma.done %s296, 128
        $region32: #{tpu_custom_call.1} parent=27 // pred_fallthru
          _
        %s304 = sand.u32 %s93, 1
        %s305 = scalar_lea.sflag [#allocation6], %s304
        %s306 = sand.u32 %s93, 1
        %s307 = smul.addr %s306, 2
        %s308 = scalar_lea.vmem [#allocation5], %s307
        // Predicated region
        $region33: #{tpu_custom_call.1} parent=27 // pred_check
          %p309 = pneg %p106
        $region34: #{tpu_custom_call.1} parent=27 // pred_check_branch
          %311 = sbr.rel (%p309) target = $region36
        $region35: #{tpu_custom_call.1} parent=27 // pred_region
          %312 = dma.done %s305, 32
        $region36: #{tpu_custom_call.1} parent=27 // pred_fallthru
          _
        %s313 = sand.u32 %s63, 1
        %s314 = scalar_lea.sflag [#allocation3], %s313
        %s315 = sand.u32 %s63, 1
        %s316 = smul.addr %s315, 8
        %s317 = scalar_lea.vmem [#allocation2], %s316
        %p318 = pneg %p76
        %p319 = pneg %p73
        %s320 = sand.u32 %s93, 1
        %s321 = scalar_lea.sflag [#allocation6], %s320
        %s322 = sand.u32 %s93, 1
        %s323 = smul.addr %s322, 2
        %s324 = scalar_lea.vmem [#allocation5], %s323
        %p325 = pneg %p106
        %p326 = pneg %p103
        %p327 = pneg %p136
        %p328 = pneg %p133
        %s329 = sand.u32 %s123, 1
        %s330 = scalar_lea.sflag [#allocation4], %s329
        %s331 = sand.u32 %s123, 1
        %s332 = scalar_lea.vmem [#allocation7], %s331
        %p333 = pneg %p166
        %p334 = pneg %p163
        %s335 = sand.u32 %s32, 1
        %s336 = scalar_lea.sflag [#allocation9], %s335
        %s337 = sand.u32 %s153, 1
        %s338 = smul.addr %s337, 4
        %s339 = scalar_lea.vmem [#allocation8], %s338
        %p340 = pneg %p196
        %p341 = pneg %p193
        %s342 = sand.u32 %s32, 1
        %s343 = scalar_lea.sflag [#allocation9], %s342
        %s344 = sand.u32 %s183, 1
        %s345 = smul.addr %s344, 4
        %s346 = scalar_lea.vmem [#allocation10], %s345
        %p347 = pneg %p226
        %p348 = pneg %p223
        %s349 = sand.u32 %s213, 1
        %s350 = scalar_lea.sflag [#allocation12], %s349
        %s351 = sand.u32 %s213, 1
        %s352 = smul.addr %s351, 4
        %s353 = scalar_lea.vmem [#allocation11], %s352
        %s354 = sadd.s32 %s37, %s39
        %s355 = sadd.s32 %s37, %s39
        %s356 = smul.u32 %s37, 2
        %s357 = sadd.s32 %s356, %s38
        %s358 = smul.u32 %s37, 2
        %s359 = sadd.s32 %s358, %s38
        %s360 = smul.u32 %s37, 2
        %s361 = sadd.s32 %s360, %s38
        %s362 = smul.u32 %s37, 2
        %s363 = sadd.s32 %s362, %s38
        %p364 = scmp.eq.s32.totalorder %s39, 0
        // Predicated region
        $region37: #{tpu_custom_call.1} parent=27 // pred_check
          %p365 = pneg %p364
        $region38: #{tpu_custom_call.1} parent=27 // pred_check_branch
          %367 = sbr.rel (%p365) target = $region40
        $region39: #{tpu_custom_call.1} parent=27 // pred_region
          %368 = vst [vmem:[%s332] sm:$0x1] 0.0
          %369 = vst [vmem:[%s339] sm:$0xf] 0.0
          %370 = vst [vmem:[%s346] sm:$0xf] 0.0
          %371 = vst [vmem:[%s353] sm:$0xf] 0.0
        $region40: #{tpu_custom_call.1} parent=27 // pred_fallthru
          _
        %v372 = vld [vmem:[%s299] sm:$0x3]
        %v373 = vld [vmem:[%s299 + $0x2] sm:$0x3]
        %v374 = vld [vmem:[%s299 + $0x4] sm:$0x3]
        %v375 = vld [vmem:[%s299 + $0x6] sm:$0x3]
        %v376 = vld [vmem:[%s308] sm:$0x3]
        %vm377 = vcmask 1041408
        %v378 = vsel %vm377, %v372, -inf
        %v379 = vsel %vm377, %v373, -inf
        %v380 = vsel %vm377, %v374, -inf
        %v381 = vsel %vm377, %v375, -inf
        %v382 = vmax.f32 %v378, %v379
        %v383 = vmax.f32 %v380, %v381
        %v384 = vmax.f32 %v382, %v383
        %v385 = vsub.f32 %v372, %v384
        %v386 = vsub.f32 %v373, %v384
        %v387 = vsub.f32 %v374, %v384
        %v388 = vsub.f32 %v375, %v384
        %v389 = vmul.f32 %v385, 1.442695
        %v390 = vpow.pop %v389
        %v391 = vmul.f32 %v386, 1.442695
        %v392 = vpow.pop %v391
        %v393 = vmul.f32 %v387, 1.442695
        %v394 = vpow.pop %v393
        %v395 = vmul.f32 %v388, 1.442695
        %v396 = vpow.pop %v395
        %v397 = vsel %vm377, %v390, 0.0
        %v398 = vsel %vm377, %v392, 0.0
        %v399 = vadd.f32 %v397, %v398
        %v400 = vsel %vm377, %v394, 0.0
        %v401 = vadd.f32 %v399, %v400
        %v402 = vsel %vm377, %v396, 0.0
        %v403 = vadd.f32 %v401, %v402
        %v404 = vrcp.pop %v403
        %v405 = vmul.f32 %v390, %v404
        %v406 = vmul.f32 %v392, %v404
        %v407 = vmul.f32 %v394, %v404
        %v408 = vmul.f32 %v396, %v404
        %v409 = vlog2.pop %v403
        %v410 = vmul.f32 %v409, 0.6931472
        %v411 = vadd.f32 %v384, %v410
        %vm412 = vcmp.eq.s32.totalorder %v376, 0
        %vm413 = vcmp.eq.s32.totalorder %v376, 1
        %vm414 = vcmp.eq.s32.totalorder %v376, 2
        %vm415 = vcmp.eq.s32.totalorder %v376, 3
        %v416 = vsel %vm412, %v372, 0.0
        %v417 = vsel %vm413, %v373, 0.0
        %v418 = vsel %vm414, %v374, 0.0
        %v419 = vsel %vm415, %v375, 0.0
        %v420 = vsel %vm377, %v416, 0.0
        %v421 = vsel %vm377, %v417, 0.0
        %v422 = vadd.f32 %v420, %v421
        %v423 = vsel %vm377, %v418, 0.0
        %v424 = vadd.f32 %v422, %v423
        %v425 = vsel %vm377, %v419, 0.0
        %v426 = vadd.f32 %v424, %v425
        %v427 = vsub.f32 %v411, %v426
        %v428 = vsub.f32 0.0, %v427
        %v429 = vmul.f32 %v428, 1.442695
        %v430 = vpow.pop %v429
        %v431 = vmul.f32 %v405, %v405
        %v432 = vmul.f32 %v406, %v406
        %v433 = vmul.f32 %v407, %v407
        %v434 = vmul.f32 %v408, %v408
        %v435 = vld [vmem:[%s332] sm:$0x1]
        %v436 = vsel %vm377, %v427, 0.0
        %v437 = vrot.slane %v436, 4
        %v438 = vadd.f32 %v436, %v437
        %v439 = vrot.slane %v438, 2
        %v440 = vadd.f32 %v438, %v439
        %v441 = vrot.slane %v440, 1
        %v442 = vadd.f32 %v440, %v441
        %v443 = vadd.f32 %v435, %v442
        %444 = vst [vmem:[%s332] sm:$0x1] %v443
        %v445 = vld [vmem:[%s339] sm:$0xf]
        %v446 = vsel %vm412, %v430, 0.0
        %v447 = vsel %vm413, %v430, 0.0
        %v448 = vsel %vm414, %v430, 0.0
        %v449 = vsel %vm415, %v430, 0.0
        %v450 = vsel %vm377, %v446, 0.0
        %v451 = vrot.slane %v450, 4
        %v452 = vadd.f32 %v450, %v451
        %v453 = vrot.slane %v452, 2
        %v454 = vadd.f32 %v452, %v453
        %v455 = vrot.slane %v454, 1
        %v456 = vadd.f32 %v454, %v455
        %v457 = vsel %vm377, %v447, 0.0
        %v458 = vrot.slane %v457, 4
        %v459 = vadd.f32 %v457, %v458
        %v460 = vrot.slane %v459, 2
        %v461 = vadd.f32 %v459, %v460
        %v462 = vrot.slane %v461, 1
        %v463 = vadd.f32 %v461, %v462
        %v464 = vsel %vm377, %v448, 0.0
        %v465 = vrot.slane %v464, 4
        %v466 = vadd.f32 %v464, %v465
        %v467 = vrot.slane %v466, 2
        %v468 = vadd.f32 %v466, %v467
        %v469 = vrot.slane %v468, 1
        %v470 = vadd.f32 %v468, %v469
        %v471 = vsel %vm377, %v449, 0.0
        %v472 = vrot.slane %v471, 4
        %v473 = vadd.f32 %v471, %v472
        %v474 = vrot.slane %v473, 2
        %v475 = vadd.f32 %v473, %v474
        %v476 = vrot.slane %v475, 1
        %v477 = vadd.f32 %v475, %v476
        %vm482 = vcmask 1041409
        %v483 = vsel %vm482, %v463, %v456
        %vm484 = vcmask 1042434
        %v485 = vsel %vm484, %v470, %v483
        %vm486 = vcmask 1043459
        %v487 = vsel %vm486, %v477, %v485
        %v489 = vadd.f32 %v445, %v487
        %490 = vst [vmem:[%s339] sm:$0xf] %v489
        %v491 = vld [vmem:[%s346] sm:$0xf]
        %v492 = vsel %vm377, %v431, 0.0
        %v493 = vrot.slane %v492, 4
        %v494 = vadd.f32 %v492, %v493
        %v495 = vrot.slane %v494, 2
        %v496 = vadd.f32 %v494, %v495
        %v497 = vrot.slane %v496, 1
        %v498 = vadd.f32 %v496, %v497
        %v499 = vsel %vm377, %v432, 0.0
        %v500 = vrot.slane %v499, 4
        %v501 = vadd.f32 %v499, %v500
        %v502 = vrot.slane %v501, 2
        %v503 = vadd.f32 %v501, %v502
        %v504 = vrot.slane %v503, 1
        %v505 = vadd.f32 %v503, %v504
        %v506 = vsel %vm377, %v433, 0.0
        %v507 = vrot.slane %v506, 4
        %v508 = vadd.f32 %v506, %v507
        %v509 = vrot.slane %v508, 2
        %v510 = vadd.f32 %v508, %v509
        %v511 = vrot.slane %v510, 1
        %v512 = vadd.f32 %v510, %v511
        %v513 = vsel %vm377, %v434, 0.0
        %v514 = vrot.slane %v513, 4
        %v515 = vadd.f32 %v513, %v514
        %v516 = vrot.slane %v515, 2
        %v517 = vadd.f32 %v515, %v516
        %v518 = vrot.slane %v517, 1
        %v519 = vadd.f32 %v517, %v518
        %v524 = vsel %vm482, %v505, %v498
        %v525 = vsel %vm484, %v512, %v524
        %v526 = vsel %vm486, %v519, %v525
        %v528 = vadd.f32 %v491, %v526
        %529 = vst [vmem:[%s346] sm:$0xf] %v528
        %v530 = vld [vmem:[%s353] sm:$0xf]
        %v531 = vsel %vm412, 1.0, 0.0
        %v532 = vsel %vm413, 1.0, 0.0
        %v533 = vsel %vm414, 1.0, 0.0
        %v534 = vsel %vm415, 1.0, 0.0
        %v535 = vsel %vm377, %v531, 0.0
        %v536 = vrot.slane %v535, 4
        %v537 = vadd.f32 %v535, %v536
        %v538 = vrot.slane %v537, 2
        %v539 = vadd.f32 %v537, %v538
        %v540 = vrot.slane %v539, 1
        %v541 = vadd.f32 %v539, %v540
        %v542 = vsel %vm377, %v532, 0.0
        %v543 = vrot.slane %v542, 4
        %v544 = vadd.f32 %v542, %v543
        %v545 = vrot.slane %v544, 2
        %v546 = vadd.f32 %v544, %v545
        %v547 = vrot.slane %v546, 1
        %v548 = vadd.f32 %v546, %v547
        %v549 = vsel %vm377, %v533, 0.0
        %v550 = vrot.slane %v549, 4
        %v551 = vadd.f32 %v549, %v550
        %v552 = vrot.slane %v551, 2
        %v553 = vadd.f32 %v551, %v552
        %v554 = vrot.slane %v553, 1
        %v555 = vadd.f32 %v553, %v554
        %v556 = vsel %vm377, %v534, 0.0
        %v557 = vrot.slane %v556, 4
        %v558 = vadd.f32 %v556, %v557
        %v559 = vrot.slane %v558, 2
        %v560 = vadd.f32 %v558, %v559
        %v561 = vrot.slane %v560, 1
        %v562 = vadd.f32 %v560, %v561
        %v567 = vsel %vm482, %v548, %v541
        %v568 = vsel %vm484, %v555, %v567
        %v569 = vsel %vm486, %v562, %v568
        %v571 = vadd.f32 %v530, %v569
        %572 = vst [vmem:[%s353] sm:$0xf] %v571
        %s573 = sand.u32 %s123, 1
        %s574 = scalar_lea.sflag [#allocation4], %s573
        %s575 = sand.u32 %s123, 1
        %s576 = scalar_lea.vmem [#allocation7], %s575
        %s577 = sand.u32 %s32, 1
        %s578 = scalar_lea.sflag [#allocation9], %s577
        %s579 = sand.u32 %s153, 1
        %s580 = smul.addr %s579, 4
        %s581 = scalar_lea.vmem [#allocation8], %s580
        %s582 = sand.u32 %s32, 1
        %s583 = scalar_lea.sflag [#allocation9], %s582
        %s584 = sand.u32 %s183, 1
        %s585 = smul.addr %s584, 4
        %s586 = scalar_lea.vmem [#allocation10], %s585
        %s587 = sand.u32 %s213, 1
        %s588 = scalar_lea.sflag [#allocation12], %s587
        %s589 = sand.u32 %s213, 1
        %s590 = smul.addr %s589, 4
        %s591 = scalar_lea.vmem [#allocation11], %s590
        // Predicated region
        $region41: #{tpu_custom_call.1} parent=27 // pred_check
          %p592 = pneg %p133
        $region42: #{tpu_custom_call.1} parent=27 // pred_check_branch
          %594 = sbr.rel (%p592) target = $region44
        $region43: #{tpu_custom_call.1} parent=27 // pred_region
          %s595 = smul.u32 %s37, 2
          %s596 = sadd.s32 %s595, %s38
          %s598 = ssub.s32 16, 16
          %599 = vsyncadd %s574, %s598
          %s600 = smul.addr %s596, 16
          %s601 = scalar_lea.hbm %s2, %s600
          %s603 = sshll.u32 %s576, 4
          %s604 = int_to_ptr.vmem [resolvable:$true] %s603
          %606 = dma.vmem_to_hbm [thread:$0]  %s604, 16, %s601, %s574
        $region44: #{tpu_custom_call.1} parent=27 // pred_fallthru
          _
        // Predicated region
        $region45: #{tpu_custom_call.1} parent=27 // pred_check
          %p607 = pneg %p163
        $region46: #{tpu_custom_call.1} parent=27 // pred_check_branch
          %609 = sbr.rel (%p607) target = $region48
        $region47: #{tpu_custom_call.1} parent=27 // pred_region
          %s610 = smul.u32 %s37, 2
          %s611 = sadd.s32 %s610, %s38
          %s613 = ssub.s32 64, 64
          %614 = vsyncadd %s578, %s613
          %s615 = smul.addr %s611, 64
          %s616 = scalar_lea.hbm %s3, %s615
          %s618 = sshll.u32 %s581, 4
          %s619 = int_to_ptr.vmem [resolvable:$true] %s618
          %621 = dma.vmem_to_hbm [thread:$0]  %s619, 64, %s616, %s578
        $region48: #{tpu_custom_call.1} parent=27 // pred_fallthru
          _
        // Predicated region
        $region49: #{tpu_custom_call.1} parent=27 // pred_check
          %p622 = pneg %p193
        $region50: #{tpu_custom_call.1} parent=27 // pred_check_branch
          %624 = sbr.rel (%p622) target = $region52
        $region51: #{tpu_custom_call.1} parent=27 // pred_region
          %s625 = smul.u32 %s37, 2
          %s626 = sadd.s32 %s625, %s38
          %s628 = ssub.s32 64, 64
          %629 = vsyncadd %s583, %s628
          %s630 = smul.addr %s626, 64
          %s631 = scalar_lea.hbm %s4, %s630
          %s633 = sshll.u32 %s586, 4
          %s634 = int_to_ptr.vmem [resolvable:$true] %s633
          %636 = dma.vmem_to_hbm [thread:$0]  %s634, 64, %s631, %s583
        $region52: #{tpu_custom_call.1} parent=27 // pred_fallthru
          _
        // Predicated region
        $region53: #{tpu_custom_call.1} parent=27 // pred_check
          %p637 = pneg %p223
        $region54: #{tpu_custom_call.1} parent=27 // pred_check_branch
          %639 = sbr.rel (%p637) target = $region56
        $region55: #{tpu_custom_call.1} parent=27 // pred_region
          %s640 = smul.u32 %s37, 2
          %s641 = sadd.s32 %s640, %s38
          %s643 = ssub.s32 64, 64
          %644 = vsyncadd %s588, %s643
          %s645 = smul.addr %s641, 64
          %s646 = scalar_lea.hbm %s5, %s645
          %s648 = sshll.u32 %s591, 4
          %s649 = int_to_ptr.vmem [resolvable:$true] %s648
          %651 = dma.vmem_to_hbm [thread:$0]  %s649, 64, %s646, %s588
        $region56: #{tpu_custom_call.1} parent=27 // pred_fallthru
          _
      $region28: #{tpu_custom_call.1} parent=5 // pred_fallthru
        _
      %p652 = scmp.le.s32.totalorder 2, %s27
      // Predicated region
      $region57: #{tpu_custom_call.1} parent=5 // pred_check
        %p653 = pneg %p652
      $region58: #{tpu_custom_call.1} parent=5 // pred_check_branch
        %655 = sbr.rel (%p653) target = $region60
      $region59: #{tpu_custom_call.1} parent=5 // pred_region
        %s656 = ssub.s32 %s27, 2
        // Predicated region
        $region61: #{tpu_custom_call.1} parent=59 // pred_check
          %p657 = pneg %p139
        $region62: #{tpu_custom_call.1} parent=59 // pred_check_branch
          %659 = sbr.rel (%p657) target = $region64
        $region63: #{tpu_custom_call.1} parent=59 // pred_region
          %s660 = sand.u32 %s124, 1
          %s661 = scalar_lea.sflag [#allocation4], %s660
          %s662 = sand.u32 %s124, 1
          %s663 = scalar_lea.vmem [#allocation7], %s662
          %664 = dma.done %s661, 16
        $region64: #{tpu_custom_call.1} parent=59 // pred_fallthru
          _
        // Predicated region
        $region65: #{tpu_custom_call.1} parent=59 // pred_check
          %p665 = pneg %p169
        $region66: #{tpu_custom_call.1} parent=59 // pred_check_branch
          %667 = sbr.rel (%p665) target = $region68
        $region67: #{tpu_custom_call.1} parent=59 // pred_region
          %s668 = sand.u32 %s33, 1
          %s669 = scalar_lea.sflag [#allocation9], %s668
          %s670 = sand.u32 %s154, 1
          %s671 = smul.addr %s670, 4
          %s672 = scalar_lea.vmem [#allocation8], %s671
          %673 = dma.done %s669, 64
        $region68: #{tpu_custom_call.1} parent=59 // pred_fallthru
          _
        // Predicated region
        $region69: #{tpu_custom_call.1} parent=59 // pred_check
          %p674 = pneg %p199
        $region70: #{tpu_custom_call.1} parent=59 // pred_check_branch
          %676 = sbr.rel (%p674) target = $region72
        $region71: #{tpu_custom_call.1} parent=59 // pred_region
          %s677 = sand.u32 %s33, 1
          %s678 = scalar_lea.sflag [#allocation9], %s677
          %s679 = sand.u32 %s184, 1
          %s680 = smul.addr %s679, 4
          %s681 = scalar_lea.vmem [#allocation10], %s680
          %682 = dma.done %s678, 64
        $region72: #{tpu_custom_call.1} parent=59 // pred_fallthru
          _
        // Predicated region
        $region73: #{tpu_custom_call.1} parent=59 // pred_check
          %p683 = pneg %p229
        $region74: #{tpu_custom_call.1} parent=59 // pred_check_branch
          %685 = sbr.rel (%p683) target = $region76
        $region75: #{tpu_custom_call.1} parent=59 // pred_region
          %s686 = sand.u32 %s214, 1
          %s687 = scalar_lea.sflag [#allocation12], %s686
          %s688 = sand.u32 %s214, 1
          %s689 = smul.addr %s688, 4
          %s690 = scalar_lea.vmem [#allocation11], %s689
          %691 = dma.done %s687, 64
        $region76: #{tpu_custom_call.1} parent=59 // pred_fallthru
          _
      $region60: #{tpu_custom_call.1} parent=5 // pred_fallthru
        _
    $region6: #{tpu_custom_call.1} parent=1 // loop_footer
      %s31 = sadd.s32 1, %s27
    $region7: #{tpu_custom_call.1} parent=1 // loop_footer_branch
      %26 = sbr.rel target = $region3
    $region8: #{tpu_custom_call.1} parent=1 // loop_exit
      _
    %692 = vsyncpa [#allocation3], 1
    %s693 = scalar_lea.sflag [#allocation3], 1
    %694 = vsyncpa %s693, 1
    %695 = vsyncpa [#allocation6], 1
    %s696 = scalar_lea.sflag [#allocation6], 1
    %697 = vsyncpa %s696, 1
    %698 = vsyncpa [#allocation4], 1
    %s699 = scalar_lea.sflag [#allocation4], 1
    %700 = vsyncpa %s699, 1
    %701 = vsyncpa [#allocation9], 1
    %s702 = scalar_lea.sflag [#allocation9], 1
    %703 = vsyncpa %s702, 1
    %704 = vsyncpa [#allocation12], 1
    %s705 = scalar_lea.sflag [#allocation12], 1
    %706 = vsyncpa %s705, 1

</llo_original>
